<compile_context>
chip_gen: v7x
topology: tpu7x:2x2x1
jax: 0.10.0
libtpu: 0.0.40
codegen_flags: <defaults>
</compile_context>

<pallas_src>
import jax
import jax.numpy as jnp
from jax.experimental import pallas as pl
from jax.experimental.pallas import tpu as pltpu

_LANE = 128


def _round_up(x, m):
    return ((x + m - 1) // m) * m


def _pad_axis(a, axis, target):
    pad = target - a.shape[axis]
    if pad == 0:
        return a
    widths = [(0, 0)] * a.ndim
    widths[axis] = (0, pad)
    return jnp.pad(a, widths)


def mlp_l2norm_kernel(x_ref, w1_ref, b1_ref, w2_ref, b2_ref, o_ref):
    """Row tile: Linear -> ReLU -> (Dropout=identity) -> Linear -> L2 norm.

    bf16 MXU operands with f32 accumulation; elementwise math in f32.
    """
    # (tm, Dp) @ (Dp, Hp) -> (tm, Hp), f32 accumulator on the MXU.
    h = jnp.dot(x_ref[...], w1_ref[...], preferred_element_type=jnp.float32)
    h = jnp.maximum(h + b1_ref[...], 0.0)                      # bias + ReLU (f32)
    # (tm, Hp) @ (Hp, Fp) -> (tm, Fp); feed the MXU bf16, accumulate f32.
    y = jnp.dot(h.astype(w2_ref.dtype), w2_ref[...],
                preferred_element_type=jnp.float32)
    y = y + b2_ref[...]
    # L2 normalize.  Padded feature columns are exactly zero so they do not
    # perturb the norm; rsqrt rides the EUP slot; eps guards zero-norm rows.
    inv = jax.lax.rsqrt(jnp.sum(y * y, axis=-1, keepdims=True) + 1e-12)
    o_ref[...] = (y * inv).astype(o_ref.dtype)


def lang_model_head(x, w1, b1, w2, b2, *, tm=256, out_dtype=None):
    """MLP head + L2 normalization of LangModel.

    x:  [B, S, backbone_dim]  (BERT last_hidden_state stand-in)
    w1: [backbone_dim, hdim], b1: [hdim]
    w2: [hdim, fdim],         b2: [fdim]
    Returns [B, S, fdim], L2-normalized along the last axis.
    """
    B, S, D = x.shape
    H = w1.shape[1]
    F = w2.shape[1]
    out_dtype = out_dtype or x.dtype

    rows = B * S
    rows_p = _round_up(rows, tm)        # ragged rows -> zero-pad, no assert
    Dp = _round_up(D, _LANE)
    Hp = _round_up(H, _LANE)
    Fp = _round_up(F, _LANE)

    # Zero padding is exact:
    #   * zero rows of x       -> extra output rows, sliced off below
    #   * zero cols of W1/b1   -> ReLU(0 + 0) = 0 in h; zero rows of W2 ignore them
    #   * zero cols of W2/b2   -> zero output cols, contribute 0 to the L2 norm
    xf = _pad_axis(_pad_axis(x.reshape(rows, D), 1, Dp), 0, rows_p)
    w1p = _pad_axis(_pad_axis(w1, 0, Dp), 1, Hp)
    w2p = _pad_axis(_pad_axis(w2, 0, Hp), 1, Fp)
    b1p = _pad_axis(b1, 0, Hp).reshape(1, Hp).astype(jnp.float32)
    b2p = _pad_axis(b2, 0, Fp).reshape(1, Fp).astype(jnp.float32)

    # bf16 MXU operands (full-rate on v5e/v6e/v7x) + halved DMA traffic.
    xf = xf.astype(jnp.bfloat16)
    w1p = w1p.astype(jnp.bfloat16)
    w2p = w2p.astype(jnp.bfloat16)

    grid = (rows_p // tm,)

    # VMEM budget: resident (double-buffered) weights + pipelined act/out tiles
    # + in-kernel f32 intermediates.  2x headroom, capped for v7x's 64 MiB.
    bf16_b, f32_b = 2, 4
    vmem_bytes = (
        2 * (Dp * Hp + Hp * Fp) * bf16_b      # weight blocks
        + 2 * (Hp + Fp) * f32_b               # bias blocks
        + 2 * tm * Dp * bf16_b                # activation tiles (double buffered)
        + 2 * tm * Fp * f32_b                 # output tiles (double buffered)
        + tm * (Hp + Fp) * f32_b              # f32 intermediates (h, y)
    )
    vmem_limit = int(min(max(32 * 1024 * 1024, 2 * vmem_bytes),
                         64 * 1024 * 1024))

    out = pl.pallas_call(
        mlp_l2norm_kernel,
        out_shape=jax.ShapeDtypeStruct((rows_p, Fp), out_dtype),
        grid_spec=pltpu.PrefetchScalarGridSpec(
            num_scalar_prefetch=0,
            grid=grid,
            in_specs=[
                pl.BlockSpec((tm, Dp), lambda i: (i, 0)),   # activations, row-tiled
                pl.BlockSpec((Dp, Hp), lambda i: (0, 0)),   # W1, resident
                pl.BlockSpec((1, Hp), lambda i: (0, 0)),    # b1
                pl.BlockSpec((Hp, Fp), lambda i: (0, 0)),   # W2, resident
                pl.BlockSpec((1, Fp), lambda i: (0, 0)),    # b2
            ],
            out_specs=pl.BlockSpec((tm, Fp), lambda i: (i, 0)),
        ),
        compiler_params=pltpu.CompilerParams(
            dimension_semantics=("parallel",),   # megacore sharding on v7x
            vmem_limit_bytes=vmem_limit,
        ),
    )(xf, w1p, b1p, w2p, b2p)

    return out[:rows, :F].reshape(B, S, F)


def _reference(x, w1, b1, w2, b2):
    h = jnp.maximum(x @ w1 + b1, 0.0)
    y = h @ w2 + b2
    return y / jnp.linalg.norm(y, ord=2, axis=-1, keepdims=True)


if __name__ == "__main__":
    # Small shapes consistent with the module's forward:
    #   batch=2 captions, seq=8 tokens, backbone_dim=32, hidden=32, fdim=32
    B, S, D, H, F = 2, 8, 32, 32, 32

    key = jax.random.PRNGKey(0)
    kx, k1, k2, k3, k4 = jax.random.split(key, 5)

    x = jax.random.normal(kx, (B, S, D), dtype=jnp.float32)
    w1 = jax.random.normal(k1, (D, H), dtype=jnp.float32) * 0.05   # Linear(backbone_dim, hdim)
    b1 = jax.random.normal(k2, (H,), dtype=jnp.float32) * 0.01
    w2 = jax.random.normal(k3, (H, F), dtype=jnp.float32) * 0.05   # Linear(hdim, fdim)
    b2 = jax.random.normal(k4, (F,), dtype=jnp.float32) * 0.01

    out = lang_model_head(x, w1, b1, w2, b2, tm=256)
    out = jax.block_until_ready(out)

    ref = _reference(x.reshape(B * S, D), w1, b1, w2, b2).reshape(B, S, F)
    assert out.shape == (B, S, F)
    # bf16 MXU operands -> looser tolerance vs. the f32 reference.
    max_err = float(jnp.max(jnp.abs(out - ref)))
    assert jnp.allclose(out, ref, atol=2e-2, rtol=2e-2), max_err
    # Unit-norm check along the feature axis (normalization done in f32).
    assert jnp.allclose(jnp.linalg.norm(out, axis=-1), 1.0, atol=1e-3)

    print("KERNEL_OK")
</pallas_src>

<mosaic_0001>
module attributes {stable_mosaic.version = 11 : i64} {
  func.func @mlp_l2norm_kernel(%arg0: i32, %arg1: memref<256x128xbf16, #tpu.memory_space<vmem>>, %arg2: memref<128x128xbf16, #tpu.memory_space<vmem>>, %arg3: memref<1x128xf32, #tpu.memory_space<vmem>>, %arg4: memref<128x128xbf16, #tpu.memory_space<vmem>>, %arg5: memref<1x128xf32, #tpu.memory_space<vmem>>, %arg6: memref<256x128xf32, #tpu.memory_space<vmem>>) attributes {dimension_semantics = [#tpu.dimension_semantics<parallel>], iteration_bounds = array<i64: 1>, scalar_prefetch = 0 : i64, scratch_operands = 0 : i64, tpu.core_type = #tpu.core_type<tc>, window_params = [{transform_indices = @transform_0, window_bounds = array<i64: 256, 128>}, {pipeline_mode = #tpu.pipeline_mode<synchronous>, transform_indices = @transform_1, window_bounds = array<i64: 128, 128>}, {pipeline_mode = #tpu.pipeline_mode<synchronous>, transform_indices = @transform_2, window_bounds = array<i64: 1, 128>}, {pipeline_mode = #tpu.pipeline_mode<synchronous>, transform_indices = @transform_3, window_bounds = array<i64: 128, 128>}, {pipeline_mode = #tpu.pipeline_mode<synchronous>, transform_indices = @transform_4, window_bounds = array<i64: 1, 128>}, {transform_indices = @transform_5, window_bounds = array<i64: 256, 128>}]} {
    %c0 = arith.constant 0 : index
    %c0_0 = arith.constant 0 : index
    %0 = vector.load %arg1[%c0, %c0_0] : memref<256x128xbf16, #tpu.memory_space<vmem>>, vector<256x128xbf16>
    %c0_1 = arith.constant 0 : index
    %c0_2 = arith.constant 0 : index
    %1 = vector.load %arg2[%c0_1, %c0_2] : memref<128x128xbf16, #tpu.memory_space<vmem>>, vector<128x128xbf16>
    %cst = arith.constant dense<0.000000e+00> : vector<256x128xf32>
    %2 = tpu.matmul %0, %1, %cst {dimension_numbers = #tpu.dot_dimension_numbers<[1], [0], [0], [1], [0, 0, 1, 1], [], []>} : vector<256x128xbf16>, vector<128x128xbf16>, vector<256x128xf32> -> vector<256x128xf32>
    %c0_3 = arith.constant 0 : index
    %c0_4 = arith.constant 0 : index
    %3 = vector.load %arg3[%c0_3, %c0_4] : memref<1x128xf32, #tpu.memory_space<vmem>>, vector<1x128xf32>
    %4 = vector.broadcast %3 : vector<1x128xf32> to vector<256x128xf32>
    %5 = arith.addf %2, %4 : vector<256x128xf32>
    %cst_5 = arith.constant 0.000000e+00 : f32
    %6 = vector.broadcast %cst_5 : f32 to vector<256x128xf32>
    %7 = arith.maximumf %5, %6 : vector<256x128xf32>
    %8 = arith.truncf %7 : vector<256x128xf32> to vector<256x128xbf16>
    %c0_6 = arith.constant 0 : index
    %c0_7 = arith.constant 0 : index
    %9 = vector.load %arg4[%c0_6, %c0_7] : memref<128x128xbf16, #tpu.memory_space<vmem>>, vector<128x128xbf16>
    %cst_8 = arith.constant dense<0.000000e+00> : vector<256x128xf32>
    %10 = tpu.matmul %8, %9, %cst_8 {dimension_numbers = #tpu.dot_dimension_numbers<[1], [0], [0], [1], [0, 0, 1, 1], [], []>} : vector<256x128xbf16>, vector<128x128xbf16>, vector<256x128xf32> -> vector<256x128xf32>
    %c0_9 = arith.constant 0 : index
    %c0_10 = arith.constant 0 : index
    %11 = vector.load %arg5[%c0_9, %c0_10] : memref<1x128xf32, #tpu.memory_space<vmem>>, vector<1x128xf32>
    %12 = vector.broadcast %11 : vector<1x128xf32> to vector<256x128xf32>
    %13 = arith.addf %10, %12 : vector<256x128xf32>
    %14 = arith.mulf %13, %13 : vector<256x128xf32>
    %cst_11 = arith.constant dense<0.000000e+00> : vector<256xf32>
    %15 = vector.multi_reduction <add>, %14, %cst_11 [1] : vector<256x128xf32> to vector<256xf32>
    %16 = vector.shape_cast %15 : vector<256xf32> to vector<256x1xf32>
    %cst_12 = arith.constant 9.99999996E-13 : f32
    %17 = vector.broadcast %cst_12 : f32 to vector<256x1xf32>
    %18 = arith.addf %16, %17 : vector<256x1xf32>
    %19 = math.rsqrt %18 : vector<256x1xf32>
    %20 = vector.broadcast %19 : vector<256x1xf32> to vector<256x128xf32>
    %21 = arith.mulf %13, %20 : vector<256x128xf32>
    %c0_13 = arith.constant 0 : index
    %c0_14 = arith.constant 0 : index
    %22 = vector.load %arg6[%c0_13, %c0_14] : memref<256x128xf32, #tpu.memory_space<vmem>>, vector<256x128xf32>
    tpu.vector_store %arg6[%c0_13, %c0_14], %21 {strides = array<i32>} : memref<256x128xf32, #tpu.memory_space<vmem>>, vector<256x128xf32>,
    return
  }
  func.func @transform_0(%arg0: i32) -> (i32, i32) {
    %c0_i32 = arith.constant 0 : i32
    %c0_i32_0 = arith.constant 0 : i32
    return %arg0, %c0_i32 : i32, i32
  }
  func.func @transform_1(%arg0: i32) -> (i32, i32) {
    %c0_i32 = arith.constant 0 : i32
    %c0_i32_0 = arith.constant 0 : i32
    %c0_i32_1 = arith.constant 0 : i32
    return %c0_i32, %c0_i32_0 : i32, i32
  }
  func.func @transform_2(%arg0: i32) -> (i32, i32) {
    %c0_i32 = arith.constant 0 : i32
    %c0_i32_0 = arith.constant 0 : i32
    %c0_i32_1 = arith.constant 0 : i32
    return %c0_i32, %c0_i32_0 : i32, i32
  }
  func.func @transform_3(%arg0: i32) -> (i32, i32) {
    %c0_i32 = arith.constant 0 : i32
    %c0_i32_0 = arith.constant 0 : i32
    %c0_i32_1 = arith.constant 0 : i32
    return %c0_i32, %c0_i32_0 : i32, i32
  }
  func.func @transform_4(%arg0: i32) -> (i32, i32) {
    %c0_i32 = arith.constant 0 : i32
    %c0_i32_0 = arith.constant 0 : i32
    %c0_i32_1 = arith.constant 0 : i32
    return %c0_i32, %c0_i32_0 : i32, i32
  }
  func.func @transform_5(%arg0: i32) -> (i32, i32) {
    %c0_i32 = arith.constant 0 : i32
    %c0_i32_0 = arith.constant 0 : i32
    return %arg0, %c0_i32 : i32, i32
  }
}

</mosaic_0001>

<llo_original>
// kernel: tpu_custom_call.1
$region0: #{tpu_custom_call.1}
  #allocation0 [shape = 'u32[]', space=smem, size = 0x4, offset = 0x4, fixed_abs, tag = 'smem constant byte address 0x4 - core index']
  #allocation1 [shape = 'u32[144,128]{1,0:T(1,128)}', space=vmem, size = 0x12000, scoped, tag = 'internal scratch']
  %s0 = inlined_call_operand.hbm [shape: bf16[256,128], index: 0, kind: input, shape index: {}]
  %s1 = inlined_call_operand.hbm [shape: bf16[128,128], index: 1, kind: input, shape index: {}]
  %s2 = inlined_call_operand.vmem [shape: f32[1,128], index: 2, kind: input, shape index: {}]
  %s3 = inlined_call_operand.hbm [shape: bf16[128,128], index: 3, kind: input, shape index: {}]
  %s4 = inlined_call_operand.vmem [shape: f32[1,128], index: 4, kind: input, shape index: {}]
  %s5 = inlined_call_operand.hbm [shape: f32[256,128], index: 5, kind: output, shape index: {}]
  %s6 = sld [smem:[#allocation0]]
  $region42: #{tpu_custom_call.1} parent=0
    _
  %s8 = ssub.s32 1, %s6
  %s9 = scalar_select 0, %s8, %s6
  $region1: #{tpu_custom_call.1} parent=0
    #allocation2 [shape = 'u8[65536]{0}', space=vmem, size = 0x10000, scoped, tag = 'input window, operand 0, single buffered']
    #allocation3 [shape = 's32[1]{0}', space=sflag, size = 0x4, scoped, tag = 'scoped memory for tpu_custom_call.1']
    #allocation4 [shape = 's32[1]{0}', space=sflag, size = 0x4, scoped, tag = 'scoped memory for tpu_custom_call.1']
    #allocation5 [shape = 'u8[32768]{0}', space=vmem, size = 0x8000, scoped, tag = 'input window, operand 1, single buffered']
    #allocation6 [shape = 's32[1]{0}', space=sflag, size = 0x4, scoped, tag = 'scoped memory for tpu_custom_call.1']
    #allocation7 [shape = 'u8[32768]{0}', space=vmem, size = 0x8000, scoped, tag = 'input window, operand 3, single buffered']
    #allocation8 [shape = 'u8[131072]{0}', space=vmem, size = 0x20000, scoped, tag = 'output window, operand 0, single buffered']
    %10 = vsyncpa [#allocation3], 0
    %11 = vsyncpa [#allocation6], 0
    %12 = vsyncpa [#allocation4], 0
    // Predicated region
    $region2: #{tpu_custom_call.1} parent=1 // pred_check
      _
    $region3: #{tpu_custom_call.1} parent=1 // pred_check_branch
      %14 = sbr.rel (0) target = $region5
    $region4: #{tpu_custom_call.1} parent=1 // pred_region
      %s16 = ssub.s32 2048, 2048
      %17 = vsyncadd [#allocation3], %s16
      %s18 = sshll.u32 [#allocation2], 4
      %s19 = int_to_ptr.vmem [resolvable:$true] %s18
      %24 = dma.hbm_to_vmem [thread:$0]  %s0, 2048, %s19, [#allocation3], 64, 64, 4
    $region5: #{tpu_custom_call.1} parent=1 // pred_fallthru
      _
    // Predicated region
    $region6: #{tpu_custom_call.1} parent=1 // pred_check
      _
    $region7: #{tpu_custom_call.1} parent=1 // pred_check_branch
      %26 = sbr.rel (0) target = $region9
    $region8: #{tpu_custom_call.1} parent=1 // pred_region
      %s28 = ssub.s32 1024, 1024
      %29 = vsyncadd [#allocation6], %s28
      %s30 = sshll.u32 [#allocation5], 4
      %s31 = int_to_ptr.vmem [resolvable:$true] %s30
      %36 = dma.hbm_to_vmem [thread:$0]  %s1, 1024, %s31, [#allocation6], 64, 64, 4
    $region9: #{tpu_custom_call.1} parent=1 // pred_fallthru
      _
    // Predicated region
    $region10: #{tpu_custom_call.1} parent=1 // pred_check
      _
    $region11: #{tpu_custom_call.1} parent=1 // pred_check_branch
      %38 = sbr.rel (0) target = $region13
    $region12: #{tpu_custom_call.1} parent=1 // pred_region
      _
    $region13: #{tpu_custom_call.1} parent=1 // pred_fallthru
      _
    // Predicated region
    $region14: #{tpu_custom_call.1} parent=1 // pred_check
      _
    $region15: #{tpu_custom_call.1} parent=1 // pred_check_branch
      %40 = sbr.rel (0) target = $region17
    $region16: #{tpu_custom_call.1} parent=1 // pred_region
      %s42 = ssub.s32 1024, 1024
      %43 = vsyncadd [#allocation6], %s42
      %s44 = sshll.u32 [#allocation7], 4
      %s45 = int_to_ptr.vmem [resolvable:$true] %s44
      %50 = dma.hbm_to_vmem [thread:$0]  %s3, 1024, %s45, [#allocation6], 64, 64, 4
    $region17: #{tpu_custom_call.1} parent=1 // pred_fallthru
      _
    // Predicated region
    $region18: #{tpu_custom_call.1} parent=1 // pred_check
      _
    $region19: #{tpu_custom_call.1} parent=1 // pred_check_branch
      %52 = sbr.rel (0) target = $region21
    $region20: #{tpu_custom_call.1} parent=1 // pred_region
      _
    $region21: #{tpu_custom_call.1} parent=1 // pred_fallthru
      _
    // Predicated region
    $region22: #{tpu_custom_call.1} parent=1 // pred_check
      _
    $region23: #{tpu_custom_call.1} parent=1 // pred_check_branch
      %54 = sbr.rel (0) target = $region25
    $region24: #{tpu_custom_call.1} parent=1 // pred_region
      %55 = dma.done [#allocation3], 2048
    $region25: #{tpu_custom_call.1} parent=1 // pred_fallthru
      _
    // Predicated region
    $region26: #{tpu_custom_call.1} parent=1 // pred_check
      _
    $region27: #{tpu_custom_call.1} parent=1 // pred_check_branch
      %57 = sbr.rel (0) target = $region29
    $region28: #{tpu_custom_call.1} parent=1 // pred_region
      %58 = dma.done [#allocation6], 1024
    $region29: #{tpu_custom_call.1} parent=1 // pred_fallthru
      _
    // Predicated region
    $region30: #{tpu_custom_call.1} parent=1 // pred_check
      _
    $region31: #{tpu_custom_call.1} parent=1 // pred_check_branch
      %60 = sbr.rel (0) target = $region33
    $region32: #{tpu_custom_call.1} parent=1 // pred_region
      %61 = dma.done [#allocation6], 1024
    $region33: #{tpu_custom_call.1} parent=1 // pred_fallthru
      _
    %v63 = vld [vmem:[#allocation2] sm:$0xf]
    %v64 = vld [vmem:[#allocation2 + $0x4] sm:$0xf]
    %v65 = vld [vmem:[#allocation2 + $0x8] sm:$0xf]
    %v66 = vld [vmem:[#allocation2 + $0xc] sm:$0xf]
    %v67 = vld [vmem:[#allocation2 + $0x10] sm:$0xf]
    %v68 = vld [vmem:[#allocation2 + $0x14] sm:$0xf]
    %v69 = vld [vmem:[#allocation2 + $0x18] sm:$0xf]
    %v70 = vld [vmem:[#allocation2 + $0x1c] sm:$0xf]
    %v71 = vld [vmem:[#allocation2 + $0x20] sm:$0xf]
    %v72 = vld [vmem:[#allocation2 + $0x24] sm:$0xf]
    %v73 = vld [vmem:[#allocation2 + $0x28] sm:$0xf]
    %v74 = vld [vmem:[#allocation2 + $0x2c] sm:$0xf]
    %v75 = vld [vmem:[#allocation2 + $0x30] sm:$0xf]
    %v76 = vld [vmem:[#allocation2 + $0x34] sm:$0xf]
    %v77 = vld [vmem:[#allocation2 + $0x38] sm:$0xf]
    %v78 = vld [vmem:[#allocation2 + $0x3c] sm:$0xf]
    %v79 = vld [vmem:[#allocation2 + $0x40] sm:$0xf]
    %v80 = vld [vmem:[#allocation2 + $0x44] sm:$0xf]
    %v81 = vld [vmem:[#allocation2 + $0x48] sm:$0xf]
    %v82 = vld [vmem:[#allocation2 + $0x4c] sm:$0xf]
    %v83 = vld [vmem:[#allocation2 + $0x50] sm:$0xf]
    %v84 = vld [vmem:[#allocation2 + $0x54] sm:$0xf]
    %v85 = vld [vmem:[#allocation2 + $0x58] sm:$0xf]
    %v86 = vld [vmem:[#allocation2 + $0x5c] sm:$0xf]
    %v87 = vld [vmem:[#allocation2 + $0x60] sm:$0xf]
    %v88 = vld [vmem:[#allocation2 + $0x64] sm:$0xf]
    %v89 = vld [vmem:[#allocation2 + $0x68] sm:$0xf]
    %v90 = vld [vmem:[#allocation2 + $0x6c] sm:$0xf]
    %v91 = vld [vmem:[#allocation2 + $0x70] sm:$0xf]
    %v92 = vld [vmem:[#allocation2 + $0x74] sm:$0xf]
    %v93 = vld [vmem:[#allocation2 + $0x78] sm:$0xf]
    %v94 = vld [vmem:[#allocation2 + $0x7c] sm:$0xf]
    %v95 = vld [vmem:[#allocation5] sm:$0xf]
    %v96 = vld [vmem:[#allocation5 + $0x4] sm:$0xf]
    %v97 = vld [vmem:[#allocation5 + $0x8] sm:$0xf]
    %v98 = vld [vmem:[#allocation5 + $0xc] sm:$0xf]
    %v99 = vld [vmem:[#allocation5 + $0x10] sm:$0xf]
    %v100 = vld [vmem:[#allocation5 + $0x14] sm:$0xf]
    %v101 = vld [vmem:[#allocation5 + $0x18] sm:$0xf]
    %v102 = vld [vmem:[#allocation5 + $0x1c] sm:$0xf]
    %v103 = vld [vmem:[#allocation5 + $0x20] sm:$0xf]
    %v104 = vld [vmem:[#allocation5 + $0x24] sm:$0xf]
    %v105 = vld [vmem:[#allocation5 + $0x28] sm:$0xf]
    %v106 = vld [vmem:[#allocation5 + $0x2c] sm:$0xf]
    %v107 = vld [vmem:[#allocation5 + $0x30] sm:$0xf]
    %v108 = vld [vmem:[#allocation5 + $0x34] sm:$0xf]
    %v109 = vld [vmem:[#allocation5 + $0x38] sm:$0xf]
    %v110 = vld [vmem:[#allocation5 + $0x3c] sm:$0xf]
    %v111 = vld [vmem:[%s2] sm:$0x1]
    %v113 = vlaneseq
    %v114 = vshrl.u32 %v113, 7
    %v115 = vsub.s32 0, %v114
    %v116 = vrot.slane %v111, %v115
    %v150 = vunpack.c.l.b16 %v63
    %v151 = vunpack.c.l.b16 %v64
    %v152 = vunpack.c.l.b16 %v65
    %v153 = vunpack.c.l.b16 %v66
    %v154 = vunpack.c.l.b16 %v67
    %v155 = vunpack.c.l.b16 %v68
    %v156 = vunpack.c.l.b16 %v69
    %v157 = vunpack.c.l.b16 %v70
    %v158 = vunpack.c.l.b16 %v71
    %v159 = vunpack.c.l.b16 %v72
    %v160 = vunpack.c.l.b16 %v73
    %v161 = vunpack.c.l.b16 %v74
    %v162 = vunpack.c.l.b16 %v75
    %v163 = vunpack.c.l.b16 %v76
    %v164 = vunpack.c.l.b16 %v77
    %v165 = vunpack.c.l.b16 %v78
    %v166 = vunpack.c.l.b16 %v79
    %v167 = vunpack.c.l.b16 %v80
    %v168 = vunpack.c.l.b16 %v81
    %v169 = vunpack.c.l.b16 %v82
    %v170 = vunpack.c.l.b16 %v83
    %v171 = vunpack.c.l.b16 %v84
    %v172 = vunpack.c.l.b16 %v85
    %v173 = vunpack.c.l.b16 %v86
    %v174 = vunpack.c.l.b16 %v87
    %v175 = vunpack.c.l.b16 %v88
    %v176 = vunpack.c.l.b16 %v89
    %v177 = vunpack.c.l.b16 %v90
    %v178 = vunpack.c.l.b16 %v91
    %v179 = vunpack.c.l.b16 %v92
    %v180 = vunpack.c.l.b16 %v93
    %v181 = vunpack.c.l.b16 %v94
    %v182 = vpack.c.b16 %v151, %v150
    %v183 = vpack.c.b16 %v153, %v152
    %v184 = vpack.c.b16 %v155, %v154
    %v185 = vpack.c.b16 %v157, %v156
    %v186 = vpack.c.b16 %v159, %v158
    %v187 = vpack.c.b16 %v161, %v160
    %v188 = vpack.c.b16 %v163, %v162
    %v189 = vpack.c.b16 %v165, %v164
    %v190 = vpack.c.b16 %v167, %v166
    %v191 = vpack.c.b16 %v169, %v168
    %v192 = vpack.c.b16 %v171, %v170
    %v193 = vpack.c.b16 %v173, %v172
    %v194 = vpack.c.b16 %v175, %v174
    %v195 = vpack.c.b16 %v177, %v176
    %v196 = vpack.c.b16 %v179, %v178
    %v197 = vpack.c.b16 %v181, %v180
    %v230 = vunpack.c.l.b16 %v95
    %v231 = vunpack.c.l.b16 %v96
    %v232 = vunpack.c.l.b16 %v97
    %v233 = vunpack.c.l.b16 %v98
    %v234 = vunpack.c.l.b16 %v99
    %v235 = vunpack.c.l.b16 %v100
    %v236 = vunpack.c.l.b16 %v101
    %v237 = vunpack.c.l.b16 %v102
    %v238 = vunpack.c.l.b16 %v103
    %v239 = vunpack.c.l.b16 %v104
    %v240 = vunpack.c.l.b16 %v105
    %v241 = vunpack.c.l.b16 %v106
    %v242 = vunpack.c.l.b16 %v107
    %v243 = vunpack.c.l.b16 %v108
    %v244 = vunpack.c.l.b16 %v109
    %v245 = vunpack.c.l.b16 %v110
    %v246 = vpack.c.b16 %v231, %v230
    %v247 = vpack.c.b16 %v233, %v232
    %v248 = vpack.c.b16 %v235, %v234
    %v249 = vpack.c.b16 %v237, %v236
    %v250 = vpack.c.b16 %v239, %v238
    %v251 = vpack.c.b16 %v241, %v240
    %v252 = vpack.c.b16 %v243, %v242
    %v253 = vpack.c.b16 %v245, %v244
    %262 = vmatprep.subr.bf16.mxu0 0
    %263 = vmatpush1.bf16.msra.mxu0 %v246
    %264 = vmatprep.subr.bf16.mxu0 0
    %265 = vmatpush1.bf16.msra.mxu0 %v247
    %266 = vmatprep.subr.bf16.mxu0 0
    %267 = vmatpush1.bf16.msra.mxu0 %v248
    %268 = vmatprep.subr.bf16.mxu0 0
    %269 = vmatpush1.bf16.msra.mxu0 %v249
    %270 = vmatprep.subr.bf16.mxu0 0
    %271 = vmatpush1.bf16.msra.mxu0 %v250
    %272 = vmatprep.subr.bf16.mxu0 0
    %273 = vmatpush1.bf16.msra.mxu0 %v251
    %274 = vmatprep.subr.bf16.mxu0 0
    %275 = vmatpush1.bf16.msra.mxu0 %v252
    %276 = vmatprep.subr.bf16.mxu0 0
    %277 = vmatpush1.bf16.msra.mxu0 %v253
    %278 = vmatprep.subr.bf16.mxu0 0
    %279 = vmatpush1.bf16.msra.mxu0 0
    %280 = vmatprep.subr.bf16.mxu0 0
    %281 = vmatpush1.bf16.msra.mxu0 0
    %282 = vmatprep.subr.bf16.mxu0 0
    %283 = vmatpush1.bf16.msra.mxu0 0
    %284 = vmatprep.subr.bf16.mxu0 0
    %285 = vmatpush1.bf16.msra.mxu0 0
    %286 = vmatprep.subr.bf16.mxu0 0
    %287 = vmatpush1.bf16.msra.mxu0 0
    %288 = vmatprep.subr.bf16.mxu0 0
    %289 = vmatpush1.bf16.msra.mxu0 0
    %290 = vmatprep.subr.bf16.mxu0 0
    %291 = vmatpush1.bf16.msra.mxu0 0
    %292 = vmatprep.subr.bf16.mxu0 0
    %293 = vmatpush1.bf16.msra.mxu0 0
    %294 = vmatprep.mubr.bf16.mxu0 0
    %295 = vmatmul.mubr.bf16.gmra.mrb[0].mxu0 %v182
    %v296 = vpop.f32.mrb[0].mxu0
    %v297 = vadd.f32 %v116, %v296
    %v298 = vpop.f32.mrb[0].mxu0
    %v299 = vpop.f32.mrb[0].mxu0
    %v300 = vadd.f32 %v116, %v299
    %v301 = vpop.f32.mrb[0].mxu0
    %302 = vmatprep.mubr.bf16.mxu0 0
    %303 = vmatmul.mubr.bf16.gmra.mrb[0].mxu0 %v183
    %v304 = vpop.f32.mrb[0].mxu0
    %v305 = vadd.f32 %v116, %v304
    %v306 = vpop.f32.mrb[0].mxu0
    %v307 = vpop.f32.mrb[0].mxu0
    %v308 = vadd.f32 %v116, %v307
    %v309 = vpop.f32.mrb[0].mxu0
    %310 = vmatprep.mubr.bf16.mxu0 0
    %311 = vmatmul.mubr.bf16.gmra.mrb[0].mxu0 %v184
    %v312 = vpop.f32.mrb[0].mxu0
    %v313 = vadd.f32 %v116, %v312
    %v314 = vpop.f32.mrb[0].mxu0
    %v315 = vpop.f32.mrb[0].mxu0
    %v316 = vadd.f32 %v116, %v315
    %v317 = vpop.f32.mrb[0].mxu0
    %318 = vmatprep.mubr.bf16.mxu0 0
    %319 = vmatmul.mubr.bf16.gmra.mrb[0].mxu0 %v185
    %v320 = vpop.f32.mrb[0].mxu0
    %v321 = vadd.f32 %v116, %v320
    %v322 = vpop.f32.mrb[0].mxu0
    %v323 = vpop.f32.mrb[0].mxu0
    %v324 = vadd.f32 %v116, %v323
    %v325 = vpop.f32.mrb[0].mxu0
    %326 = vmatprep.mubr.bf16.mxu0 0
    %327 = vmatmul.mubr.bf16.gmra.mrb[0].mxu0 %v186
    %v328 = vpop.f32.mrb[0].mxu0
    %v329 = vadd.f32 %v116, %v328
    %v330 = vpop.f32.mrb[0].mxu0
    %v331 = vpop.f32.mrb[0].mxu0
    %v332 = vadd.f32 %v116, %v331
    %v333 = vpop.f32.mrb[0].mxu0
    %334 = vmatprep.mubr.bf16.mxu0 0
    %335 = vmatmul.mubr.bf16.gmra.mrb[0].mxu0 %v187
    %v336 = vpop.f32.mrb[0].mxu0
    %v337 = vadd.f32 %v116, %v336
    %v338 = vpop.f32.mrb[0].mxu0
    %v339 = vpop.f32.mrb[0].mxu0
    %v340 = vadd.f32 %v116, %v339
    %v341 = vpop.f32.mrb[0].mxu0
    %342 = vmatprep.mubr.bf16.mxu0 0
    %343 = vmatmul.mubr.bf16.gmra.mrb[0].mxu0 %v188
    %v344 = vpop.f32.mrb[0].mxu0
    %v345 = vadd.f32 %v116, %v344
    %v346 = vpop.f32.mrb[0].mxu0
    %v347 = vpop.f32.mrb[0].mxu0
    %v348 = vadd.f32 %v116, %v347
    %v349 = vpop.f32.mrb[0].mxu0
    %350 = vmatprep.mubr.bf16.mxu0 0
    %351 = vmatmul.mubr.bf16.gmra.mrb[0].mxu0 %v189
    %v352 = vpop.f32.mrb[0].mxu0
    %v353 = vadd.f32 %v116, %v352
    %v354 = vpop.f32.mrb[0].mxu0
    %v355 = vpop.f32.mrb[0].mxu0
    %v356 = vadd.f32 %v116, %v355
    %v357 = vpop.f32.mrb[0].mxu0
    %358 = vmatprep.mubr.bf16.mxu0 0
    %359 = vmatmul.mubr.bf16.gmra.mrb[0].mxu0 %v190
    %v360 = vpop.f32.mrb[0].mxu0
    %v361 = vadd.f32 %v116, %v360
    %v362 = vpop.f32.mrb[0].mxu0
    %v363 = vpop.f32.mrb[0].mxu0
    %v364 = vadd.f32 %v116, %v363
    %v365 = vpop.f32.mrb[0].mxu0
    %366 = vmatprep.mubr.bf16.mxu0 0
    %367 = vmatmul.mubr.bf16.gmra.mrb[0].mxu0 %v191
    %v368 = vpop.f32.mrb[0].mxu0
    %v369 = vadd.f32 %v116, %v368
    %v370 = vpop.f32.mrb[0].mxu0
    %v371 = vpop.f32.mrb[0].mxu0
    %v372 = vadd.f32 %v116, %v371
    %v373 = vpop.f32.mrb[0].mxu0
    %374 = vmatprep.mubr.bf16.mxu0 0
    %375 = vmatmul.mubr.bf16.gmra.mrb[0].mxu0 %v192
    %v376 = vpop.f32.mrb[0].mxu0
    %v377 = vadd.f32 %v116, %v376
    %v378 = vpop.f32.mrb[0].mxu0
    %v379 = vpop.f32.mrb[0].mxu0
    %v380 = vadd.f32 %v116, %v379
    %v381 = vpop.f32.mrb[0].mxu0
    %382 = vmatprep.mubr.bf16.mxu0 0
    %383 = vmatmul.mubr.bf16.gmra.mrb[0].mxu0 %v193
    %v384 = vpop.f32.mrb[0].mxu0
    %v385 = vadd.f32 %v116, %v384
    %v386 = vpop.f32.mrb[0].mxu0
    %v387 = vpop.f32.mrb[0].mxu0
    %v388 = vadd.f32 %v116, %v387
    %v389 = vpop.f32.mrb[0].mxu0
    %390 = vmatprep.mubr.bf16.mxu0 0
    %391 = vmatmul.mubr.bf16.gmra.mrb[0].mxu0 %v194
    %v392 = vpop.f32.mrb[0].mxu0
    %v393 = vadd.f32 %v116, %v392
    %v394 = vpop.f32.mrb[0].mxu0
    %v395 = vpop.f32.mrb[0].mxu0
    %v396 = vadd.f32 %v116, %v395
    %v397 = vpop.f32.mrb[0].mxu0
    %398 = vmatprep.mubr.bf16.mxu0 0
    %399 = vmatmul.mubr.bf16.gmra.mrb[0].mxu0 %v195
    %v400 = vpop.f32.mrb[0].mxu0
    %v401 = vadd.f32 %v116, %v400
    %v402 = vpop.f32.mrb[0].mxu0
    %v403 = vpop.f32.mrb[0].mxu0
    %v404 = vadd.f32 %v116, %v403
    %v405 = vpop.f32.mrb[0].mxu0
    %406 = vmatprep.mubr.bf16.mxu0 0
    %407 = vmatmul.mubr.bf16.gmra.mrb[0].mxu0 %v196
    %v408 = vpop.f32.mrb[0].mxu0
    %v409 = vadd.f32 %v116, %v408
    %v410 = vpop.f32.mrb[0].mxu0
    %v411 = vpop.f32.mrb[0].mxu0
    %v412 = vadd.f32 %v116, %v411
    %v413 = vpop.f32.mrb[0].mxu0
    %414 = vmatprep.mubr.bf16.mxu0 0
    %415 = vmatmul.mubr.bf16.gmra.mrb[0].mxu0 %v197
    %v416 = vpop.f32.mrb[0].mxu0
    %v417 = vadd.f32 %v116, %v416
    %v418 = vpop.f32.mrb[0].mxu0
    %v419 = vpop.f32.mrb[0].mxu0
    %v420 = vadd.f32 %v116, %v419
    %v421 = vpop.f32.mrb[0].mxu0
    %422 = vdwg.mxu0
    %v423 = vmax.f32 %v297, 0.0
    %v424 = vmax.f32 %v300, 0.0
    %v425 = vmax.f32 %v305, 0.0
    %v426 = vmax.f32 %v308, 0.0
    %v427 = vmax.f32 %v313, 0.0
    %v428 = vmax.f32 %v316, 0.0
    %v429 = vmax.f32 %v321, 0.0
    %v430 = vmax.f32 %v324, 0.0
    %v431 = vmax.f32 %v329, 0.0
    %v432 = vmax.f32 %v332, 0.0
    %v433 = vmax.f32 %v337, 0.0
    %v434 = vmax.f32 %v340, 0.0
    %v435 = vmax.f32 %v345, 0.0
    %v436 = vmax.f32 %v348, 0.0
    %v437 = vmax.f32 %v353, 0.0
    %v438 = vmax.f32 %v356, 0.0
    %v439 = vmax.f32 %v361, 0.0
    %v440 = vmax.f32 %v364, 0.0
    %v441 = vmax.f32 %v369, 0.0
    %v442 = vmax.f32 %v372, 0.0
    %v443 = vmax.f32 %v377, 0.0
    %v444 = vmax.f32 %v380, 0.0
    %v445 = vmax.f32 %v385, 0.0
    %v446 = vmax.f32 %v388, 0.0
    %v447 = vmax.f32 %v393, 0.0
    %v448 = vmax.f32 %v396, 0.0
    %v449 = vmax.f32 %v401, 0.0
    %v450 = vmax.f32 %v404, 0.0
    %v451 = vmax.f32 %v409, 0.0
    %v452 = vmax.f32 %v412, 0.0
    %v453 = vmax.f32 %v417, 0.0
    %v454 = vmax.f32 %v420, 0.0
    %v455 = vpack.c.bf16 %v424, %v423
    %v456 = vpack.c.bf16 %v426, %v425
    %v457 = vpack.c.bf16 %v428, %v427
    %v458 = vpack.c.bf16 %v430, %v429
    %v459 = vpack.c.bf16 %v432, %v431
    %v460 = vpack.c.bf16 %v434, %v433
    %v461 = vpack.c.bf16 %v436, %v435
    %v462 = vpack.c.bf16 %v438, %v437
    %v463 = vpack.c.bf16 %v440, %v439
    %v464 = vpack.c.bf16 %v442, %v441
    %v465 = vpack.c.bf16 %v444, %v443
    %v466 = vpack.c.bf16 %v446, %v445
    %v467 = vpack.c.bf16 %v448, %v447
    %v468 = vpack.c.bf16 %v450, %v449
    %v469 = vpack.c.bf16 %v452, %v451
    %v470 = vpack.c.bf16 %v454, %v453
    %v471 = vld [vmem:[#allocation7] sm:$0xf]
    %v472 = vld [vmem:[#allocation7 + $0x4] sm:$0xf]
    %v473 = vld [vmem:[#allocation7 + $0x8] sm:$0xf]
    %v474 = vld [vmem:[#allocation7 + $0xc] sm:$0xf]
    %v475 = vld [vmem:[#allocation7 + $0x10] sm:$0xf]
    %v476 = vld [vmem:[#allocation7 + $0x14] sm:$0xf]
    %v477 = vld [vmem:[#allocation7 + $0x18] sm:$0xf]
    %v478 = vld [vmem:[#allocation7 + $0x1c] sm:$0xf]
    %v479 = vld [vmem:[#allocation7 + $0x20] sm:$0xf]
    %v480 = vld [vmem:[#allocation7 + $0x24] sm:$0xf]
    %v481 = vld [vmem:[#allocation7 + $0x28] sm:$0xf]
    %v482 = vld [vmem:[#allocation7 + $0x2c] sm:$0xf]
    %v483 = vld [vmem:[#allocation7 + $0x30] sm:$0xf]
    %v484 = vld [vmem:[#allocation7 + $0x34] sm:$0xf]
    %v485 = vld [vmem:[#allocation7 + $0x38] sm:$0xf]
    %v486 = vld [vmem:[#allocation7 + $0x3c] sm:$0xf]
    %v487 = vld [vmem:[%s4] sm:$0x1]
    %v489 = vlaneseq
    %v490 = vshrl.u32 %v489, 7
    %v491 = vsub.s32 0, %v490
    %v492 = vrot.slane %v487, %v491
    %v510 = vunpack.c.l.b16 %v471
    %v511 = vunpack.c.l.b16 %v472
    %v512 = vunpack.c.l.b16 %v473
    %v513 = vunpack.c.l.b16 %v474
    %v514 = vunpack.c.l.b16 %v475
    %v515 = vunpack.c.l.b16 %v476
    %v516 = vunpack.c.l.b16 %v477
    %v517 = vunpack.c.l.b16 %v478
    %v518 = vunpack.c.l.b16 %v479
    %v519 = vunpack.c.l.b16 %v480
    %v520 = vunpack.c.l.b16 %v481
    %v521 = vunpack.c.l.b16 %v482
    %v522 = vunpack.c.l.b16 %v483
    %v523 = vunpack.c.l.b16 %v484
    %v524 = vunpack.c.l.b16 %v485
    %v525 = vunpack.c.l.b16 %v486
    %v526 = vpack.c.b16 %v511, %v510
    %v527 = vpack.c.b16 %v513, %v512
    %v528 = vpack.c.b16 %v515, %v514
    %v529 = vpack.c.b16 %v517, %v516
    %v530 = vpack.c.b16 %v519, %v518
    %v531 = vpack.c.b16 %v521, %v520
    %v532 = vpack.c.b16 %v523, %v522
    %v533 = vpack.c.b16 %v525, %v524
    %542 = vmatprep.subr.bf16.mxu0 0
    %543 = vmatpush1.bf16.msra.mxu0 %v526
    %544 = vmatprep.subr.bf16.mxu0 0
    %545 = vmatpush1.bf16.msra.mxu0 %v527
    %546 = vmatprep.subr.bf16.mxu0 0
    %547 = vmatpush1.bf16.msra.mxu0 %v528
    %548 = vmatprep.subr.bf16.mxu0 0
    %549 = vmatpush1.bf16.msra.mxu0 %v529
    %550 = vmatprep.subr.bf16.mxu0 0
    %551 = vmatpush1.bf16.msra.mxu0 %v530
    %552 = vmatprep.subr.bf16.mxu0 0
    %553 = vmatpush1.bf16.msra.mxu0 %v531
    %554 = vmatprep.subr.bf16.mxu0 0
    %555 = vmatpush1.bf16.msra.mxu0 %v532
    %556 = vmatprep.subr.bf16.mxu0 0
    %557 = vmatpush1.bf16.msra.mxu0 %v533
    %558 = vmatprep.subr.bf16.mxu0 0
    %559 = vmatpush1.bf16.msra.mxu0 0
    %560 = vmatprep.subr.bf16.mxu0 0
    %561 = vmatpush1.bf16.msra.mxu0 0
    %562 = vmatprep.subr.bf16.mxu0 0
    %563 = vmatpush1.bf16.msra.mxu0 0
    %564 = vmatprep.subr.bf16.mxu0 0
    %565 = vmatpush1.bf16.msra.mxu0 0
    %566 = vmatprep.subr.bf16.mxu0 0
    %567 = vmatpush1.bf16.msra.mxu0 0
    %568 = vmatprep.subr.bf16.mxu0 0
    %569 = vmatpush1.bf16.msra.mxu0 0
    %570 = vmatprep.subr.bf16.mxu0 0
    %571 = vmatpush1.bf16.msra.mxu0 0
    %572 = vmatprep.subr.bf16.mxu0 0
    %573 = vmatpush1.bf16.msra.mxu0 0
    %574 = vmatprep.mubr.bf16.mxu0 0
    %575 = vmatmul.mubr.bf16.gmra.mrb[0].mxu0 %v455
    %v576 = vpop.f32.mrb[0].mxu0
    %v577 = vadd.f32 %v492, %v576
    %v578 = vpop.f32.mrb[0].mxu0
    %v579 = vpop.f32.mrb[0].mxu0
    %v580 = vadd.f32 %v492, %v579
    %v581 = vpop.f32.mrb[0].mxu0
    %582 = vmatprep.mubr.bf16.mxu0 0
    %583 = vmatmul.mubr.bf16.gmra.mrb[0].mxu0 %v456
    %v584 = vpop.f32.mrb[0].mxu0
    %v585 = vadd.f32 %v492, %v584
    %v586 = vpop.f32.mrb[0].mxu0
    %v587 = vpop.f32.mrb[0].mxu0
    %v588 = vadd.f32 %v492, %v587
    %v589 = vpop.f32.mrb[0].mxu0
    %590 = vmatprep.mubr.bf16.mxu0 0
    %591 = vmatmul.mubr.bf16.gmra.mrb[0].mxu0 %v457
    %v592 = vpop.f32.mrb[0].mxu0
    %v593 = vadd.f32 %v492, %v592
    %v594 = vpop.f32.mrb[0].mxu0
    %v595 = vpop.f32.mrb[0].mxu0
    %v596 = vadd.f32 %v492, %v595
    %v597 = vpop.f32.mrb[0].mxu0
    %598 = vmatprep.mubr.bf16.mxu0 0
    %599 = vmatmul.mubr.bf16.gmra.mrb[0].mxu0 %v458
    %v600 = vpop.f32.mrb[0].mxu0
    %v601 = vadd.f32 %v492, %v600
    %v602 = vpop.f32.mrb[0].mxu0
    %v603 = vpop.f32.mrb[0].mxu0
    %v604 = vadd.f32 %v492, %v603
    %v605 = vpop.f32.mrb[0].mxu0
    %606 = vmatprep.mubr.bf16.mxu0 0
    %607 = vmatmul.mubr.bf16.gmra.mrb[0].mxu0 %v459
    %v608 = vpop.f32.mrb[0].mxu0
    %v609 = vadd.f32 %v492, %v608
    %v610 = vpop.f32.mrb[0].mxu0
    %v611 = vpop.f32.mrb[0].mxu0
    %v612 = vadd.f32 %v492, %v611
    %v613 = vpop.f32.mrb[0].mxu0
    %614 = vmatprep.mubr.bf16.mxu0 0
    %615 = vmatmul.mubr.bf16.gmra.mrb[0].mxu0 %v460
    %v616 = vpop.f32.mrb[0].mxu0
    %v617 = vadd.f32 %v492, %v616
    %v618 = vpop.f32.mrb[0].mxu0
    %v619 = vpop.f32.mrb[0].mxu0
    %v620 = vadd.f32 %v492, %v619
    %v621 = vpop.f32.mrb[0].mxu0
    %622 = vmatprep.mubr.bf16.mxu0 0
    %623 = vmatmul.mubr.bf16.gmra.mrb[0].mxu0 %v461
    %v624 = vpop.f32.mrb[0].mxu0
    %v625 = vadd.f32 %v492, %v624
    %v626 = vpop.f32.mrb[0].mxu0
    %v627 = vpop.f32.mrb[0].mxu0
    %v628 = vadd.f32 %v492, %v627
    %v629 = vpop.f32.mrb[0].mxu0
    %630 = vmatprep.mubr.bf16.mxu0 0
    %631 = vmatmul.mubr.bf16.gmra.mrb[0].mxu0 %v462
    %v632 = vpop.f32.mrb[0].mxu0
    %v633 = vadd.f32 %v492, %v632
    %v634 = vpop.f32.mrb[0].mxu0
    %v635 = vpop.f32.mrb[0].mxu0
    %v636 = vadd.f32 %v492, %v635
    %v637 = vpop.f32.mrb[0].mxu0
    %638 = vmatprep.mubr.bf16.mxu0 0
    %639 = vmatmul.mubr.bf16.gmra.mrb[0].mxu0 %v463
    %v640 = vpop.f32.mrb[0].mxu0
    %v641 = vadd.f32 %v492, %v640
    %v642 = vpop.f32.mrb[0].mxu0
    %v643 = vpop.f32.mrb[0].mxu0
    %v644 = vadd.f32 %v492, %v643
    %v645 = vpop.f32.mrb[0].mxu0
    %646 = vmatprep.mubr.bf16.mxu0 0
    %647 = vmatmul.mubr.bf16.gmra.mrb[0].mxu0 %v464
    %v648 = vpop.f32.mrb[0].mxu0
    %v649 = vadd.f32 %v492, %v648
    %v650 = vpop.f32.mrb[0].mxu0
    %v651 = vpop.f32.mrb[0].mxu0
    %v652 = vadd.f32 %v492, %v651
    %v653 = vpop.f32.mrb[0].mxu0
    %654 = vmatprep.mubr.bf16.mxu0 0
    %655 = vmatmul.mubr.bf16.gmra.mrb[0].mxu0 %v465
    %v656 = vpop.f32.mrb[0].mxu0
    %v657 = vadd.f32 %v492, %v656
    %v658 = vpop.f32.mrb[0].mxu0
    %v659 = vpop.f32.mrb[0].mxu0
    %v660 = vadd.f32 %v492, %v659
    %v661 = vpop.f32.mrb[0].mxu0
    %662 = vmatprep.mubr.bf16.mxu0 0
    %663 = vmatmul.mubr.bf16.gmra.mrb[0].mxu0 %v466
    %v664 = vpop.f32.mrb[0].mxu0
    %v665 = vadd.f32 %v492, %v664
    %v666 = vpop.f32.mrb[0].mxu0
    %v667 = vpop.f32.mrb[0].mxu0
    %v668 = vadd.f32 %v492, %v667
    %v669 = vpop.f32.mrb[0].mxu0
    %670 = vmatprep.mubr.bf16.mxu0 0
    %671 = vmatmul.mubr.bf16.gmra.mrb[0].mxu0 %v467
    %v672 = vpop.f32.mrb[0].mxu0
    %v673 = vadd.f32 %v492, %v672
    %v674 = vpop.f32.mrb[0].mxu0
    %v675 = vpop.f32.mrb[0].mxu0
    %v676 = vadd.f32 %v492, %v675
    %v677 = vpop.f32.mrb[0].mxu0
    %678 = vmatprep.mubr.bf16.mxu0 0
    %679 = vmatmul.mubr.bf16.gmra.mrb[0].mxu0 %v468
    %v680 = vpop.f32.mrb[0].mxu0
    %v681 = vadd.f32 %v492, %v680
    %v682 = vpop.f32.mrb[0].mxu0
    %v683 = vpop.f32.mrb[0].mxu0
    %v684 = vadd.f32 %v492, %v683
    %v685 = vpop.f32.mrb[0].mxu0
    %686 = vmatprep.mubr.bf16.mxu0 0
    %687 = vmatmul.mubr.bf16.gmra.mrb[0].mxu0 %v469
    %v688 = vpop.f32.mrb[0].mxu0
    %v689 = vadd.f32 %v492, %v688
    %v690 = vpop.f32.mrb[0].mxu0
    %v691 = vpop.f32.mrb[0].mxu0
    %v692 = vadd.f32 %v492, %v691
    %v693 = vpop.f32.mrb[0].mxu0
    %694 = vmatprep.mubr.bf16.mxu0 0
    %695 = vmatmul.mubr.bf16.gmra.mrb[0].mxu0 %v470
    %v696 = vpop.f32.mrb[0].mxu0
    %v697 = vadd.f32 %v492, %v696
    %v698 = vpop.f32.mrb[0].mxu0
    %v699 = vpop.f32.mrb[0].mxu0
    %v700 = vadd.f32 %v492, %v699
    %v701 = vpop.f32.mrb[0].mxu0
    %702 = vdwg.mxu0
    %v703 = vmul.f32 %v577, %v577
    %v704 = vmul.f32 %v580, %v580
    %v705 = vmul.f32 %v585, %v585
    %v706 = vmul.f32 %v588, %v588
    %v707 = vmul.f32 %v593, %v593
    %v708 = vmul.f32 %v596, %v596
    %v709 = vmul.f32 %v601, %v601
    %v710 = vmul.f32 %v604, %v604
    %v711 = vmul.f32 %v609, %v609
    %v712 = vmul.f32 %v612, %v612
    %v713 = vmul.f32 %v617, %v617
    %v714 = vmul.f32 %v620, %v620
    %v715 = vmul.f32 %v625, %v625
    %v716 = vmul.f32 %v628, %v628
    %v717 = vmul.f32 %v633, %v633
    %v718 = vmul.f32 %v636, %v636
    %v719 = vmul.f32 %v641, %v641
    %v720 = vmul.f32 %v644, %v644
    %v721 = vmul.f32 %v649, %v649
    %v722 = vmul.f32 %v652, %v652
    %v723 = vmul.f32 %v657, %v657
    %v724 = vmul.f32 %v660, %v660
    %v725 = vmul.f32 %v665, %v665
    %v726 = vmul.f32 %v668, %v668
    %v727 = vmul.f32 %v673, %v673
    %v728 = vmul.f32 %v676, %v676
    %v729 = vmul.f32 %v681, %v681
    %v730 = vmul.f32 %v684, %v684
    %v731 = vmul.f32 %v689, %v689
    %v732 = vmul.f32 %v692, %v692
    %v733 = vmul.f32 %v697, %v697
    %v734 = vmul.f32 %v700, %v700
    %735 = vadd.xlane.f32.xlu0 %v703
    %v736 = vpop.xlane.xlu0 %735
    %737 = vadd.xlane.f32.xlu0 %v704
    %v738 = vpop.xlane.xlu0 %737
    %739 = vadd.xlane.f32.xlu0 %v705
    %v740 = vpop.xlane.xlu0 %739
    %741 = vadd.xlane.f32.xlu0 %v706
    %v742 = vpop.xlane.xlu0 %741
    %743 = vadd.xlane.f32.xlu0 %v707
    %v744 = vpop.xlane.xlu0 %743
    %745 = vadd.xlane.f32.xlu0 %v708
    %v746 = vpop.xlane.xlu0 %745
    %747 = vadd.xlane.f32.xlu0 %v709
    %v748 = vpop.xlane.xlu0 %747
    %749 = vadd.xlane.f32.xlu0 %v710
    %v750 = vpop.xlane.xlu0 %749
    %751 = vadd.xlane.f32.xlu0 %v711
    %v752 = vpop.xlane.xlu0 %751
    %753 = vadd.xlane.f32.xlu0 %v712
    %v754 = vpop.xlane.xlu0 %753
    %755 = vadd.xlane.f32.xlu0 %v713
    %v756 = vpop.xlane.xlu0 %755
    %757 = vadd.xlane.f32.xlu0 %v714
    %v758 = vpop.xlane.xlu0 %757
    %759 = vadd.xlane.f32.xlu0 %v715
    %v760 = vpop.xlane.xlu0 %759
    %761 = vadd.xlane.f32.xlu0 %v716
    %v762 = vpop.xlane.xlu0 %761
    %763 = vadd.xlane.f32.xlu0 %v717
    %v764 = vpop.xlane.xlu0 %763
    %765 = vadd.xlane.f32.xlu0 %v718
    %v766 = vpop.xlane.xlu0 %765
    %767 = vadd.xlane.f32.xlu0 %v719
    %v768 = vpop.xlane.xlu0 %767
    %769 = vadd.xlane.f32.xlu0 %v720
    %v770 = vpop.xlane.xlu0 %769
    %771 = vadd.xlane.f32.xlu0 %v721
    %v772 = vpop.xlane.xlu0 %771
    %773 = vadd.xlane.f32.xlu0 %v722
    %v774 = vpop.xlane.xlu0 %773
    %775 = vadd.xlane.f32.xlu0 %v723
    %v776 = vpop.xlane.xlu0 %775
    %777 = vadd.xlane.f32.xlu0 %v724
    %v778 = vpop.xlane.xlu0 %777
    %779 = vadd.xlane.f32.xlu0 %v725
    %v780 = vpop.xlane.xlu0 %779
    %781 = vadd.xlane.f32.xlu0 %v726
    %v782 = vpop.xlane.xlu0 %781
    %783 = vadd.xlane.f32.xlu0 %v727
    %v784 = vpop.xlane.xlu0 %783
    %785 = vadd.xlane.f32.xlu0 %v728
    %v786 = vpop.xlane.xlu0 %785
    %787 = vadd.xlane.f32.xlu0 %v729
    %v788 = vpop.xlane.xlu0 %787
    %789 = vadd.xlane.f32.xlu0 %v730
    %v790 = vpop.xlane.xlu0 %789
    %791 = vadd.xlane.f32.xlu0 %v731
    %v792 = vpop.xlane.xlu0 %791
    %793 = vadd.xlane.f32.xlu0 %v732
    %v794 = vpop.xlane.xlu0 %793
    %795 = vadd.xlane.f32.xlu0 %v733
    %v796 = vpop.xlane.xlu0 %795
    %797 = vadd.xlane.f32.xlu0 %v734
    %v798 = vpop.xlane.xlu0 %797
    %v799 = vadd.f32 %v736, 1e-12
    %v800 = vadd.f32 %v738, 1e-12
    %v801 = vadd.f32 %v740, 1e-12
    %v802 = vadd.f32 %v742, 1e-12
    %v803 = vadd.f32 %v744, 1e-12
    %v804 = vadd.f32 %v746, 1e-12
    %v805 = vadd.f32 %v748, 1e-12
    %v806 = vadd.f32 %v750, 1e-12
    %v807 = vadd.f32 %v752, 1e-12
    %v808 = vadd.f32 %v754, 1e-12
    %v809 = vadd.f32 %v756, 1e-12
    %v810 = vadd.f32 %v758, 1e-12
    %v811 = vadd.f32 %v760, 1e-12
    %v812 = vadd.f32 %v762, 1e-12
    %v813 = vadd.f32 %v764, 1e-12
    %v814 = vadd.f32 %v766, 1e-12
    %v815 = vadd.f32 %v768, 1e-12
    %v816 = vadd.f32 %v770, 1e-12
    %v817 = vadd.f32 %v772, 1e-12
    %v818 = vadd.f32 %v774, 1e-12
    %v819 = vadd.f32 %v776, 1e-12
    %v820 = vadd.f32 %v778, 1e-12
    %v821 = vadd.f32 %v780, 1e-12
    %v822 = vadd.f32 %v782, 1e-12
    %v823 = vadd.f32 %v784, 1e-12
    %v824 = vadd.f32 %v786, 1e-12
    %v825 = vadd.f32 %v788, 1e-12
    %v826 = vadd.f32 %v790, 1e-12
    %v827 = vadd.f32 %v792, 1e-12
    %v828 = vadd.f32 %v794, 1e-12
    %v829 = vadd.f32 %v796, 1e-12
    %v830 = vadd.f32 %v798, 1e-12
    %v831 = vrsqrt.pop %v799
    %v832 = vrsqrt.pop %v800
    %v833 = vrsqrt.pop %v801
    %v834 = vrsqrt.pop %v802
    %v835 = vrsqrt.pop %v803
    %v836 = vrsqrt.pop %v804
    %v837 = vrsqrt.pop %v805
    %v838 = vrsqrt.pop %v806
    %v839 = vrsqrt.pop %v807
    %v840 = vrsqrt.pop %v808
    %v841 = vrsqrt.pop %v809
    %v842 = vrsqrt.pop %v810
    %v843 = vrsqrt.pop %v811
    %v844 = vrsqrt.pop %v812
    %v845 = vrsqrt.pop %v813
    %v846 = vrsqrt.pop %v814
    %v847 = vrsqrt.pop %v815
    %v848 = vrsqrt.pop %v816
    %v849 = vrsqrt.pop %v817
    %v850 = vrsqrt.pop %v818
    %v851 = vrsqrt.pop %v819
    %v852 = vrsqrt.pop %v820
    %v853 = vrsqrt.pop %v821
    %v854 = vrsqrt.pop %v822
    %v855 = vrsqrt.pop %v823
    %v856 = vrsqrt.pop %v824
    %v857 = vrsqrt.pop %v825
    %v858 = vrsqrt.pop %v826
    %v859 = vrsqrt.pop %v827
    %v860 = vrsqrt.pop %v828
    %v861 = vrsqrt.pop %v829
    %v862 = vrsqrt.pop %v830
    %v863 = vmul.f32 %v577, %v831
    %v864 = vmul.f32 %v580, %v832
    %v865 = vmul.f32 %v585, %v833
    %v866 = vmul.f32 %v588, %v834
    %v867 = vmul.f32 %v593, %v835
    %v868 = vmul.f32 %v596, %v836
    %v869 = vmul.f32 %v601, %v837
    %v870 = vmul.f32 %v604, %v838
    %v871 = vmul.f32 %v609, %v839
    %v872 = vmul.f32 %v612, %v840
    %v873 = vmul.f32 %v617, %v841
    %v874 = vmul.f32 %v620, %v842
    %v875 = vmul.f32 %v625, %v843
    %v876 = vmul.f32 %v628, %v844
    %v877 = vmul.f32 %v633, %v845
    %v878 = vmul.f32 %v636, %v846
    %v879 = vmul.f32 %v641, %v847
    %v880 = vmul.f32 %v644, %v848
    %v881 = vmul.f32 %v649, %v849
    %v882 = vmul.f32 %v652, %v850
    %v883 = vmul.f32 %v657, %v851
    %v884 = vmul.f32 %v660, %v852
    %v885 = vmul.f32 %v665, %v853
    %v886 = vmul.f32 %v668, %v854
    %v887 = vmul.f32 %v673, %v855
    %v888 = vmul.f32 %v676, %v856
    %v889 = vmul.f32 %v681, %v857
    %v890 = vmul.f32 %v684, %v858
    %v891 = vmul.f32 %v689, %v859
    %v892 = vmul.f32 %v692, %v860
    %v893 = vmul.f32 %v697, %v861
    %v894 = vmul.f32 %v700, %v862
    %895 = vst [vmem:[#allocation8] sm:$0xff] %v863
    %896 = vst [vmem:[#allocation8 + $0x8] sm:$0xff] %v864
    %897 = vst [vmem:[#allocation8 + $0x10] sm:$0xff] %v865
    %898 = vst [vmem:[#allocation8 + $0x18] sm:$0xff] %v866
    %899 = vst [vmem:[#allocation8 + $0x20] sm:$0xff] %v867
    %900 = vst [vmem:[#allocation8 + $0x28] sm:$0xff] %v868
    %901 = vst [vmem:[#allocation8 + $0x30] sm:$0xff] %v869
    %902 = vst [vmem:[#allocation8 + $0x38] sm:$0xff] %v870
    %903 = vst [vmem:[#allocation8 + $0x40] sm:$0xff] %v871
    %904 = vst [vmem:[#allocation8 + $0x48] sm:$0xff] %v872
    %905 = vst [vmem:[#allocation8 + $0x50] sm:$0xff] %v873
    %906 = vst [vmem:[#allocation8 + $0x58] sm:$0xff] %v874
    %907 = vst [vmem:[#allocation8 + $0x60] sm:$0xff] %v875
    %908 = vst [vmem:[#allocation8 + $0x68] sm:$0xff] %v876
    %909 = vst [vmem:[#allocation8 + $0x70] sm:$0xff] %v877
    %910 = vst [vmem:[#allocation8 + $0x78] sm:$0xff] %v878
    %911 = vst [vmem:[#allocation8 + $0x80] sm:$0xff] %v879
    %912 = vst [vmem:[#allocation8 + $0x88] sm:$0xff] %v880
    %913 = vst [vmem:[#allocation8 + $0x90] sm:$0xff] %v881
    %914 = vst [vmem:[#allocation8 + $0x98] sm:$0xff] %v882
    %915 = vst [vmem:[#allocation8 + $0xa0] sm:$0xff] %v883
    %916 = vst [vmem:[#allocation8 + $0xa8] sm:$0xff] %v884
    %917 = vst [vmem:[#allocation8 + $0xb0] sm:$0xff] %v885
    %918 = vst [vmem:[#allocation8 + $0xb8] sm:$0xff] %v886
    %919 = vst [vmem:[#allocation8 + $0xc0] sm:$0xff] %v887
    %920 = vst [vmem:[#allocation8 + $0xc8] sm:$0xff] %v888
    %921 = vst [vmem:[#allocation8 + $0xd0] sm:$0xff] %v889
    %922 = vst [vmem:[#allocation8 + $0xd8] sm:$0xff] %v890
    %923 = vst [vmem:[#allocation8 + $0xe0] sm:$0xff] %v891
    %924 = vst [vmem:[#allocation8 + $0xe8] sm:$0xff] %v892
    %925 = vst [vmem:[#allocation8 + $0xf0] sm:$0xff] %v893
    %926 = vst [vmem:[#allocation8 + $0xf8] sm:$0xff] %v894
    // Predicated region
    $region34: #{tpu_custom_call.1} parent=1 // pred_check
      _
    $region35: #{tpu_custom_call.1} parent=1 // pred_check_branch
      %928 = sbr.rel (0) target = $region37
    $region36: #{tpu_custom_call.1} parent=1 // pred_region
      %s930 = ssub.s32 4096, 4096
      %931 = vsyncadd [#allocation4], %s930
      %s932 = sshll.u32 [#allocation8], 4
      %s933 = int_to_ptr.vmem [resolvable:$true] %s932
      %938 = dma.vmem_to_hbm [thread:$0]  %s933, 4096, %s5, [#allocation4], 128, 128, 8
    $region37: #{tpu_custom_call.1} parent=1 // pred_fallthru
      _
    // Predicated region
    $region38: #{tpu_custom_call.1} parent=1 // pred_check
      _
    $region39: #{tpu_custom_call.1} parent=1 // pred_check_branch
      %940 = sbr.rel (0) target = $region41
    $region40: #{tpu_custom_call.1} parent=1 // pred_region
      %941 = dma.done [#allocation4], 4096
    $region41: #{tpu_custom_call.1} parent=1 // pred_fallthru
      _
    %942 = vsyncpa [#allocation3], 1
    %943 = vsyncpa [#allocation6], 1
    %944 = vsyncpa [#allocation4], 1

</llo_original>
